<compile_context>
chip_gen: v5e
topology: v5e:2x2
jax: 0.10.0
libtpu: 0.0.40
codegen_flags: <defaults>
</compile_context>

<pallas_src>
import functools
import math

import jax
import jax.numpy as jnp
from jax import lax
from jax.experimental import pallas as pl
from jax.experimental.pallas import tpu as pltpu


def _round_up(x, m):
    return ((x + m - 1) // m) * m


def _masked_graph_attention_kernel(qk_ref, v_ref, wk_ref, bk_ref, mask_ref,
                                   o_ref, *, tq, inv_tau, op_dtype):
    # Per-batch blocks (batch dim squeezed away by the BlockSpecs):
    #   qk_ref : (Tq+Tk, Fp) op_dtype  -- this batch's query rows then key rows
    #   v_ref  : (Tk,    Fp) op_dtype
    #   wk_ref : (Fp,    Kp) op_dtype  -- WK weight, transposed in the wrapper
    #   bk_ref : (1,     Kp) f32
    #   mask_ref:(Tq,    Tk) f32       -- already scaled by 1/tau
    #   o_ref  : (Tq,    Fp) f32
    x = qk_ref[...]

    # One MXU pass projects this batch's q and k rows together
    # (bf16 operands, f32 accumulation), then bias-add in f32.
    w = jnp.dot(x, wk_ref[...],
                preferred_element_type=jnp.float32) + bk_ref[...]

    # F.normalize(p=2, dim=-1): x / max(||x||, 1e-12) == x * rsqrt(max(||x||^2, 1e-24)).
    # One Newton step squares the relative error of rsqrt, so the result is
    # f32-accurate whether the backend's rsqrt is refined or the raw EUP estimate.
    ss = jnp.maximum(jnp.sum(w * w, axis=-1, keepdims=True), 1e-24)
    r = lax.rsqrt(ss)
    r = r * (1.5 - 0.5 * ss * r * r)
    w = w * r

    # Fold 1/tau into the q side once (the mask already carries 1/tau).
    wq = (w[:tq, :] * inv_tau).astype(op_dtype)
    wk = w[tq:, :].astype(op_dtype)

    # scores = wq . wk^T without materializing a transpose: contract last dims.
    scores = lax.dot_general(wq, wk, (((1,), (1,)), ((), ())),
                             preferred_element_type=jnp.float32)
    scores = scores + mask_ref[...]

    # Row softmax in f32 with EXACT normalization (the approximate EUP
    # reciprocal in the previous version cost ~8e-3 of absolute error).
    m = jnp.max(scores, axis=-1, keepdims=True)
    e = jnp.exp(scores - m)
    aff = e / jnp.sum(e, axis=-1, keepdims=True)

    out = jnp.dot(aff.astype(op_dtype), v_ref[...],
                  preferred_element_type=jnp.float32)
    o_ref[...] = out.astype(o_ref.dtype)


def masked_graph_attention(query, key, value, mask, wk_weight, wk_bias,
                           tau=1.0 / 30, op_dtype=jnp.bfloat16):
    """query/key/value: (S, B, F); mask: (Tq, Tk); wk_weight: (Kd, F) (torch
    Linear layout); wk_bias: (Kd,). Returns (Tq, B, F).

    op_dtype is the MXU operand dtype (bf16 recommended on TPU; use
    jnp.float32 for exact-f32 operands).  Accumulation and all softmax /
    normalization math are always f32."""
    Tq, B, F = query.shape
    Tk = key.shape[0]
    Kd = wk_weight.shape[0]
    f32 = jnp.float32
    inv_tau = 1.0 / float(tau)

    # Lane padding only when the feature/key dims are not already 128-multiples
    # (the module defaults 512 / 128 need none).
    Fp = _round_up(F, 128)
    Kp = _round_up(Kd, 128)

    def pad_last(a, target):
        a = a.astype(f32)
        pad = target - a.shape[-1]
        if pad:
            a = jnp.pad(a, [(0, 0)] * (a.ndim - 1) + [(0, pad)])
        return a

    # Batch-major, contiguous 2D-per-batch slabs prepared wrapper-side so the
    # kernel never permutes the middle axis in VMEM.  q and k rows of each
    # batch are concatenated so the shared WK projection is a single MXU
    # matmul per grid step.
    q_b = jnp.transpose(query, (1, 0, 2))                    # (B, Tq, F)
    k_b = jnp.transpose(key, (1, 0, 2))                      # (B, Tk, F)
    v_b = jnp.transpose(value, (1, 0, 2))                    # (B, Tk, F)
    qk = pad_last(jnp.concatenate([q_b, k_b], axis=1), Fp).astype(op_dtype)
    v_p = pad_last(v_b, Fp).astype(op_dtype)                 # (B, Tk, Fp)

    wk_t = pad_last(jnp.transpose(wk_weight), Kp)            # (F, Kp) f32
    wk_p = jnp.pad(wk_t, ((0, Fp - F), (0, 0))).astype(op_dtype)   # (Fp, Kp)
    bk_p = pad_last(wk_bias.reshape(1, Kd), Kp)              # (1, Kp) f32
    mask_s = mask.astype(f32) * inv_tau                      # (Tq, Tk)

    kernel = functools.partial(_masked_graph_attention_kernel,
                               tq=Tq, inv_tau=inv_tau, op_dtype=op_dtype)

    out_p = pl.pallas_call(
        kernel,
        out_shape=jax.ShapeDtypeStruct((B, Tq, Fp), f32),
        grid=(B,),
        in_specs=[
            pl.BlockSpec((None, Tq + Tk, Fp), lambda b: (b, 0, 0)),   # qk
            pl.BlockSpec((None, Tk, Fp), lambda b: (b, 0, 0)),        # v
            pl.BlockSpec((Fp, Kp), lambda b: (0, 0)),                 # WK^T
            pl.BlockSpec((1, Kp), lambda b: (0, 0)),                  # bias
            pl.BlockSpec((Tq, Tk), lambda b: (0, 0)),                 # mask/tau
        ],
        out_specs=pl.BlockSpec((None, Tq, Fp), lambda b: (b, 0, 0)),
        compiler_params=pltpu.CompilerParams(
            dimension_semantics=("parallel",),
            vmem_limit_bytes=32 * 1024 * 1024),
    )(qk, v_p, wk_p, bk_p, mask_s)

    # Drop padded feature columns, return the module's (Tq, B, F) layout.
    out = jnp.transpose(out_p[:, :, :F], (1, 0, 2))
    return out.astype(query.dtype)


def _reference(query, key, value, mask, wk_weight, wk_bias, tau,
               op_dtype=jnp.float32):
    """Pure-JAX mirror of the PyTorch forward.  With op_dtype=f32 it is the
    exact f32 module; with op_dtype=bf16 it applies the same MXU-operand
    rounding the kernel uses, so the comparison isolates implementation bugs
    from the (intentional) bf16 operand rounding."""
    f32 = jnp.float32
    inv_tau = 1.0 / float(tau)

    def project(x):
        y = jnp.dot(x.astype(op_dtype), jnp.transpose(wk_weight).astype(op_dtype),
                    preferred_element_type=f32)
        return y + wk_bias.astype(f32)

    def l2norm(x):
        ss = jnp.maximum(jnp.sum(x * x, axis=-1, keepdims=True), 1e-24)
        return x * lax.rsqrt(ss)

    w_q = l2norm(project(query))                              # (Tq, B, Kd) f32
    w_k = l2norm(project(key))                                # (Tk, B, Kd) f32
    scores = jnp.einsum("qbk,tbk->bqt",
                        (w_q * inv_tau).astype(op_dtype),
                        w_k.astype(op_dtype),
                        preferred_element_type=f32)
    scores = scores + (mask.astype(f32) * inv_tau)[None]
    aff = jax.nn.softmax(scores, axis=-1)                     # f32
    out = jnp.einsum("bqt,tbf->bqf", aff.astype(op_dtype),
                     value.astype(op_dtype), preferred_element_type=f32)
    return jnp.transpose(out, (1, 0, 2)).astype(query.dtype)  # (Tq, B, F)


def _make_inputs(rng, Tq, Tk, B, F, Kd):
    k1, k2, k3, k4, k5 = jax.random.split(rng, 5)
    query = jax.random.normal(k1, (Tq, B, F), dtype=jnp.float32)
    keyx = jax.random.normal(k2, (Tk, B, F), dtype=jnp.float32)
    value = jax.random.normal(k3, (Tk, B, F), dtype=jnp.float32)
    mask_bits = jax.random.bernoulli(k4, 0.8, (Tq, Tk))
    mask = jnp.where(mask_bits, 0.0, -1e9).astype(jnp.float32)
    # WK init matching the module: N(0, sqrt(2/key_dim)), bias 0.
    wk_weight = (jax.random.normal(k5, (Kd, F), dtype=jnp.float32)
                 * math.sqrt(2.0 / Kd))
    wk_bias = jnp.zeros((Kd,), dtype=jnp.float32)
    return query, keyx, value, mask, wk_weight, wk_bias


if __name__ == "__main__":
    tau = 1.0 / 30
    root = jax.random.PRNGKey(0)
    rng_a, rng_b = jax.random.split(root)

    # Tolerance note: against the matched-precision reference the expected
    # error is ~1e-5; the margin below only covers possible Mosaic-vs-XLA
    # transcendental (exp/rsqrt) implementation differences amplified by
    # 1/tau = 30 in the logits.
    ATOL = RTOL = 5e-3

    # Case A: module-default dims (feature_dim=512, key_dim=128, seq=8, B=2)
    # -> no padding path, bf16 MXU operands.
    qa, ka, va, ma, wa, ba = _make_inputs(rng_a, 8, 8, 2, 512, 128)
    out_a = masked_graph_attention(qa, ka, va, ma, wa, ba, tau=tau,
                                   op_dtype=jnp.bfloat16)
    out_a = jax.block_until_ready(out_a)
    ref_a = _reference(qa, ka, va, ma, wa, ba, tau, op_dtype=jnp.bfloat16)
    assert out_a.shape == (8, 2, 512)
    err_a = float(jnp.max(jnp.abs(out_a - ref_a)))
    assert jnp.allclose(out_a, ref_a, atol=ATOL, rtol=RTOL), err_a

    # Case B: small non-128-aligned dims (feature_dim=32, key_dim=16) to
    # exercise the lane-padding path; same bf16 operands / matched reference.
    qb, kb, vb, mb, wb, bb = _make_inputs(rng_b, 8, 8, 2, 32, 16)
    out_b = masked_graph_attention(qb, kb, vb, mb, wb, bb, tau=tau,
                                   op_dtype=jnp.bfloat16)
    out_b = jax.block_until_ready(out_b)
    ref_b = _reference(qb, kb, vb, mb, wb, bb, tau, op_dtype=jnp.bfloat16)
    assert out_b.shape == (8, 2, 32)
    err_b = float(jnp.max(jnp.abs(out_b - ref_b)))
    assert jnp.allclose(out_b, ref_b, atol=ATOL, rtol=RTOL), err_b

    print("KERNEL_OK")
</pallas_src>

<mosaic_0001>
module attributes {stable_mosaic.version = 11 : i64} {
  func.func @_masked_graph_attention_kernel(%arg0: i32, %arg1: memref<1x16x512xbf16, #tpu.memory_space<vmem>>, %arg2: memref<1x8x512xbf16, #tpu.memory_space<vmem>>, %arg3: memref<512x128xbf16, #tpu.memory_space<vmem>>, %arg4: memref<1x128xf32, #tpu.memory_space<vmem>>, %arg5: memref<8x8xf32, #tpu.memory_space<vmem>>, %arg6: memref<1x8x512xf32, #tpu.memory_space<vmem>>) attributes {dimension_semantics = [#tpu.dimension_semantics<parallel>], iteration_bounds = array<i64: 2>, scalar_prefetch = 0 : i64, scratch_operands = 0 : i64, tpu.core_type = #tpu.core_type<tc>, window_params = [{transform_indices = @transform_0, window_bounds = array<i64: 1, 16, 512>}, {transform_indices = @transform_1, window_bounds = array<i64: 1, 8, 512>}, {pipeline_mode = #tpu.pipeline_mode<synchronous>, transform_indices = @transform_2, window_bounds = array<i64: 512, 128>}, {pipeline_mode = #tpu.pipeline_mode<synchronous>, transform_indices = @transform_3, window_bounds = array<i64: 1, 128>}, {pipeline_mode = #tpu.pipeline_mode<synchronous>, transform_indices = @transform_4, window_bounds = array<i64: 8, 8>}, {transform_indices = @transform_5, window_bounds = array<i64: 1, 8, 512>}]} {
    %c0 = arith.constant 0 : index
    %c0_0 = arith.constant 0 : index
    %c0_1 = arith.constant 0 : index
    %0 = vector.load %arg1[%c0, %c0_0, %c0_1] : memref<1x16x512xbf16, #tpu.memory_space<vmem>>, vector<1x16x512xbf16>
    %1 = vector.shape_cast %0 : vector<1x16x512xbf16> to vector<16x512xbf16>
    %c0_2 = arith.constant 0 : index
    %c0_3 = arith.constant 0 : index
    %2 = vector.load %arg3[%c0_2, %c0_3] : memref<512x128xbf16, #tpu.memory_space<vmem>>, vector<512x128xbf16>
    %cst = arith.constant dense<0.000000e+00> : vector<16x128xf32>
    %3 = tpu.matmul %1, %2, %cst {dimension_numbers = #tpu.dot_dimension_numbers<[1], [0], [0], [1], [0, 0, 1, 1], [], []>} : vector<16x512xbf16>, vector<512x128xbf16>, vector<16x128xf32> -> vector<16x128xf32>
    %c0_4 = arith.constant 0 : index
    %c0_5 = arith.constant 0 : index
    %4 = vector.load %arg4[%c0_4, %c0_5] : memref<1x128xf32, #tpu.memory_space<vmem>>, vector<1x128xf32>
    %5 = vector.broadcast %4 : vector<1x128xf32> to vector<16x128xf32>
    %6 = arith.addf %3, %5 : vector<16x128xf32>
    %7 = arith.mulf %6, %6 : vector<16x128xf32>
    %cst_6 = arith.constant dense<0.000000e+00> : vector<16xf32>
    %8 = vector.multi_reduction <add>, %7, %cst_6 [1] : vector<16x128xf32> to vector<16xf32>
    %9 = vector.shape_cast %8 : vector<16xf32> to vector<16x1xf32>
    %cst_7 = arith.constant 1.000000e-24 : f32
    %10 = vector.broadcast %cst_7 : f32 to vector<16x1xf32>
    %11 = arith.maximumf %9, %10 : vector<16x1xf32>
    %12 = math.rsqrt %11 : vector<16x1xf32>
    %cst_8 = arith.constant 5.000000e-01 : f32
    %13 = vector.broadcast %cst_8 : f32 to vector<16x1xf32>
    %14 = arith.mulf %13, %11 : vector<16x1xf32>
    %15 = arith.mulf %14, %12 : vector<16x1xf32>
    %16 = arith.mulf %15, %12 : vector<16x1xf32>
    %cst_9 = arith.constant 1.500000e+00 : f32
    %17 = vector.broadcast %cst_9 : f32 to vector<16x1xf32>
    %18 = arith.subf %17, %16 : vector<16x1xf32>
    %19 = arith.mulf %12, %18 : vector<16x1xf32>
    %20 = vector.broadcast %19 : vector<16x1xf32> to vector<16x128xf32>
    %21 = arith.mulf %6, %20 : vector<16x128xf32>
    %22 = vector.extract_strided_slice %21 {offsets = [0, 0], sizes = [8, 128], strides = [1, 1]} : vector<16x128xf32> to vector<8x128xf32>
    %cst_10 = arith.constant 3.000000e+01 : f32
    %23 = vector.broadcast %cst_10 : f32 to vector<8x128xf32>
    %24 = arith.mulf %22, %23 : vector<8x128xf32>
    %25 = arith.truncf %24 : vector<8x128xf32> to vector<8x128xbf16>
    %26 = vector.extract_strided_slice %21 {offsets = [8, 0], sizes = [8, 128], strides = [1, 1]} : vector<16x128xf32> to vector<8x128xf32>
    %27 = arith.truncf %26 : vector<8x128xf32> to vector<8x128xbf16>
    %cst_11 = arith.constant dense<0.000000e+00> : vector<8x8xf32>
    %28 = tpu.matmul %25, %27, %cst_11 {dimension_numbers = #tpu.dot_dimension_numbers<[1], [1], [0], [0], [0, 0, 1, 0], [], []>} : vector<8x128xbf16>, vector<8x128xbf16>, vector<8x8xf32> -> vector<8x8xf32>
    %c0_12 = arith.constant 0 : index
    %c0_13 = arith.constant 0 : index
    %29 = vector.load %arg5[%c0_12, %c0_13] : memref<8x8xf32, #tpu.memory_space<vmem>>, vector<8x8xf32>
    %30 = arith.addf %28, %29 : vector<8x8xf32>
    %cst_14 = arith.constant dense<0xFF800000> : vector<8xf32>
    %31 = vector.multi_reduction <maximumf>, %30, %cst_14 [1] : vector<8x8xf32> to vector<8xf32>
    %32 = vector.shape_cast %31 : vector<8xf32> to vector<8x1xf32>
    %33 = vector.broadcast %32 : vector<8x1xf32> to vector<8x8xf32>
    %34 = arith.subf %30, %33 : vector<8x8xf32>
    %35 = math.exp %34 : vector<8x8xf32>
    %cst_15 = arith.constant dense<0.000000e+00> : vector<8xf32>
    %36 = vector.multi_reduction <add>, %35, %cst_15 [1] : vector<8x8xf32> to vector<8xf32>
    %37 = vector.shape_cast %36 : vector<8xf32> to vector<8x1xf32>
    %38 = vector.broadcast %37 : vector<8x1xf32> to vector<8x8xf32>
    %39 = arith.divf %35, %38 : vector<8x8xf32>
    %40 = arith.truncf %39 : vector<8x8xf32> to vector<8x8xbf16>
    %c0_16 = arith.constant 0 : index
    %c0_17 = arith.constant 0 : index
    %c0_18 = arith.constant 0 : index
    %41 = vector.load %arg2[%c0_16, %c0_17, %c0_18] : memref<1x8x512xbf16, #tpu.memory_space<vmem>>, vector<1x8x512xbf16>
    %42 = vector.shape_cast %41 : vector<1x8x512xbf16> to vector<8x512xbf16>
    %cst_19 = arith.constant dense<0.000000e+00> : vector<8x512xf32>
    %43 = tpu.matmul %40, %42, %cst_19 {dimension_numbers = #tpu.dot_dimension_numbers<[1], [0], [0], [1], [0, 0, 1, 1], [], []>} : vector<8x8xbf16>, vector<8x512xbf16>, vector<8x512xf32> -> vector<8x512xf32>
    %c0_20 = arith.constant 0 : index
    %c0_21 = arith.constant 0 : index
    %c0_22 = arith.constant 0 : index
    %44 = vector.load %arg6[%c0_20, %c0_21, %c0_22] : memref<1x8x512xf32, #tpu.memory_space<vmem>>, vector<1x8x512xf32>
    %45 = vector.shape_cast %44 : vector<1x8x512xf32> to vector<8x512xf32>
    %46 = vector.shape_cast %43 : vector<8x512xf32> to vector<1x8x512xf32>
    tpu.vector_store %arg6[%c0_20, %c0_21, %c0_22], %46 {strides = array<i32>} : memref<1x8x512xf32, #tpu.memory_space<vmem>>, vector<1x8x512xf32>,
    return
  }
  func.func @transform_0(%arg0: i32) -> (i32, i32, i32) {
    %c0_i32 = arith.constant 0 : i32
    %c0_i32_0 = arith.constant 0 : i32
    %c0_i32_1 = arith.constant 0 : i32
    return %arg0, %c0_i32, %c0_i32_0 : i32, i32, i32
  }
  func.func @transform_1(%arg0: i32) -> (i32, i32, i32) {
    %c0_i32 = arith.constant 0 : i32
    %c0_i32_0 = arith.constant 0 : i32
    %c0_i32_1 = arith.constant 0 : i32
    return %arg0, %c0_i32, %c0_i32_0 : i32, i32, i32
  }
  func.func @transform_2(%arg0: i32) -> (i32, i32) {
    %c0_i32 = arith.constant 0 : i32
    %c0_i32_0 = arith.constant 0 : i32
    %c0_i32_1 = arith.constant 0 : i32
    return %c0_i32, %c0_i32_0 : i32, i32
  }
  func.func @transform_3(%arg0: i32) -> (i32, i32) {
    %c0_i32 = arith.constant 0 : i32
    %c0_i32_0 = arith.constant 0 : i32
    %c0_i32_1 = arith.constant 0 : i32
    return %c0_i32, %c0_i32_0 : i32, i32
  }
  func.func @transform_4(%arg0: i32) -> (i32, i32) {
    %c0_i32 = arith.constant 0 : i32
    %c0_i32_0 = arith.constant 0 : i32
    %c0_i32_1 = arith.constant 0 : i32
    return %c0_i32, %c0_i32_0 : i32, i32
  }
  func.func @transform_5(%arg0: i32) -> (i32, i32, i32) {
    %c0_i32 = arith.constant 0 : i32
    %c0_i32_0 = arith.constant 0 : i32
    %c0_i32_1 = arith.constant 0 : i32
    return %arg0, %c0_i32, %c0_i32_0 : i32, i32, i32
  }
}

</mosaic_0001>

<llo_original>
// kernel: tpu_custom_call.1
$region0: #{tpu_custom_call.1}
  #allocation0 [shape = 'u32[]', space=smem, size = 0x4, offset = 0x4, fixed_abs, tag = 'smem constant byte address 0x4 - core index']
  #allocation1 [shape = 'u32[72,128]{1,0:T(1,128)}', space=vmem, size = 0x9000, scoped, tag = 'internal scratch']
  %s0 = inlined_call_operand.hbm [shape: bf16[2,16,512], index: 0, kind: input, shape index: {}]
  %s1 = inlined_call_operand.hbm [shape: bf16[2,8,512], index: 1, kind: input, shape index: {}]
  %s2 = inlined_call_operand.hbm [shape: bf16[512,128], index: 2, kind: input, shape index: {}]
  %s3 = inlined_call_operand.vmem [shape: f32[1,128], index: 3, kind: input, shape index: {}]
  %s4 = inlined_call_operand.hbm [shape: f32[8,8], index: 4, kind: input, shape index: {}]
  %s5 = inlined_call_operand.hbm [shape: f32[2,8,512], index: 5, kind: output, shape index: {}]
  %s6 = sld [smem:[#allocation0]]
  $region69: #{tpu_custom_call.1} parent=0
    _
  %s8 = ssub.s32 1, %s6
  %s9 = scalar_select 0, %s8, %s6
  $region1: #{tpu_custom_call.1} parent=0
    #allocation2 [shape = 'u8[32768]{0}', space=vmem, size = 0x8000, scoped, tag = 'input window, operand 0']
    #allocation3 [shape = 's32[2]{0}', space=sflag, size = 0x8, scoped, tag = 'scoped memory for tpu_custom_call.1']
    #allocation4 [shape = 's32[2]{0}', space=sflag, size = 0x8, scoped, tag = 'scoped memory for tpu_custom_call.1']
    #allocation5 [shape = 'u8[16384]{0}', space=vmem, size = 0x4000, scoped, tag = 'input window, operand 1']
    #allocation6 [shape = 's32[2]{0}', space=sflag, size = 0x8, scoped, tag = 'scoped memory for tpu_custom_call.1']
    #allocation7 [shape = 'u8[131072]{0}', space=vmem, size = 0x20000, scoped, tag = 'input window, operand 2, single buffered']
    #allocation8 [shape = 'u8[4096]{0}', space=vmem, size = 0x1000, scoped, tag = 'input window, operand 4, single buffered']
    #allocation9 [shape = 's32[1]{0}', space=sflag, size = 0x4, scoped, tag = 'scoped memory for tpu_custom_call.1']
    #allocation10 [shape = 'u8[32768]{0}', space=vmem, size = 0x8000, scoped, tag = 'output window, operand 0']
    %10 = vsyncpa [#allocation3], 0
    %s11 = scalar_lea.sflag [#allocation3], 1
    %12 = vsyncpa %s11, 0
    %13 = vsyncpa [#allocation6], 0
    %s14 = scalar_lea.sflag [#allocation6], 1
    %15 = vsyncpa %s14, 0
    %16 = vsyncpa [#allocation9], 0
    %17 = vsyncpa [#allocation4], 0
    %s18 = scalar_lea.sflag [#allocation4], 1
    %19 = vsyncpa %s18, 0
    loop: start=0, step=1, limit=4
    $region2: #{tpu_custom_call.1} parent=1 // loop_pre_header
      _
    $region3: #{tpu_custom_call.1} parent=1 // loop_header
      %s21 = sphi 0, %s25
      %p22 = scmp.ge.s32.totalorder %s21, 4
      %s31 = sphi 0, %s33
      %s34 = sphi 0, %s31
      %s35 = sphi 0, %s34
      %s51 = sphi 0, %s35
      %s57 = sphi 0, %s59
      %s60 = sphi 0, %s57
      %s61 = sphi 0, %s60
      %s77 = sphi 0, %s61
      %s81 = sphi 0, %s81
      %s83 = sphi 0, %s81
      %s84 = sphi 0, %s83
      %s98 = sphi 0, %s84
      %s102 = sphi 0, %s102
      %s104 = sphi 0, %s102
      %s105 = sphi 0, %s104
      %s119 = sphi 0, %s105
      %s123 = sphi 0, %s123
      %s125 = sphi 0, %s123
      %s126 = sphi 0, %s125
      %s140 = sphi 0, %s126
      %s146 = sphi 0, %s148
      %s149 = sphi 0, %s146
      %s150 = sphi 0, %s149
      %s166 = sphi 0, %s150
    $region4: #{tpu_custom_call.1} parent=1 // loop_header_branch
      %24 = sbr.rel (%p22) target = $region8
    $region5: #{tpu_custom_call.1} parent=1 // loop_body
      %s26 = ssub.s32 %s21, 1
      %s27 = ssub.s32 %s21, 2
      %s28 = sadd.s32 %s21, 1
      %s29 = ssub.s32 %s21, %s28
      %p30 = scmp.eq.s32.totalorder %s29, 0
      %s32 = sadd.s32 %s31, 1
      %s33 = scalar_select %p30, %s31, %s32
      %p36 = pneg %p30
      %p37 = scmp.eq.s32.totalorder %s21, 1
      %p38 = por %p36, %p37
      %p39 = scmp.ne.s32.totalorder %s31, %s34
      %p40 = scmp.eq.s32.totalorder %s21, 0
      %p41 = por %p39, %p40
      %p42 = scmp.ne.s32.totalorder %s31, %s34
      %p43 = scmp.eq.s32.totalorder %s26, 1
      %p44 = por %p42, %p43
      %p45 = scmp.ne.s32.totalorder %s34, %s35
      %p46 = scmp.eq.s32.totalorder %s26, 0
      %p47 = por %p45, %p46
      %p48 = scmp.ne.s32.totalorder %s34, %s35
      %p49 = scmp.eq.s32.totalorder %s27, 1
      %p50 = por %p48, %p49
      %p52 = scmp.ne.s32.totalorder %s35, %s51
      %p53 = scmp.eq.s32.totalorder %s27, 0
      %p54 = por %p52, %p53
      %s55 = ssub.s32 %s21, %s28
      %p56 = scmp.eq.s32.totalorder %s55, 0
      %s58 = sadd.s32 %s57, 1
      %s59 = scalar_select %p56, %s57, %s58
      %p62 = pneg %p56
      %p63 = scmp.eq.s32.totalorder %s21, 1
      %p64 = por %p62, %p63
      %p65 = scmp.ne.s32.totalorder %s57, %s60
      %p66 = scmp.eq.s32.totalorder %s21, 0
      %p67 = por %p65, %p66
      %p68 = scmp.ne.s32.totalorder %s57, %s60
      %p69 = scmp.eq.s32.totalorder %s26, 1
      %p70 = por %p68, %p69
      %p71 = scmp.ne.s32.totalorder %s60, %s61
      %p72 = scmp.eq.s32.totalorder %s26, 0
      %p73 = por %p71, %p72
      %p74 = scmp.ne.s32.totalorder %s60, %s61
      %p75 = scmp.eq.s32.totalorder %s27, 1
      %p76 = por %p74, %p75
      %p78 = scmp.ne.s32.totalorder %s61, %s77
      %p79 = scmp.eq.s32.totalorder %s27, 0
      %p80 = por %p78, %p79
      %s82 = sadd.s32 %s81, 1
      %p85 = scmp.eq.s32.totalorder %s21, 1
      %p86 = scmp.ne.s32.totalorder %s81, %s83
      %p87 = scmp.eq.s32.totalorder %s21, 0
      %p88 = por %p86, %p87
      %p89 = scmp.ne.s32.totalorder %s81, %s83
      %p90 = scmp.eq.s32.totalorder %s26, 1
      %p91 = por %p89, %p90
      %p92 = scmp.ne.s32.totalorder %s83, %s84
      %p93 = scmp.eq.s32.totalorder %s26, 0
      %p94 = por %p92, %p93
      %p95 = scmp.ne.s32.totalorder %s83, %s84
      %p96 = scmp.eq.s32.totalorder %s27, 1
      %p97 = por %p95, %p96
      %p99 = scmp.ne.s32.totalorder %s84, %s98
      %p100 = scmp.eq.s32.totalorder %s27, 0
      %p101 = por %p99, %p100
      %s103 = sadd.s32 %s102, 1
      %p106 = scmp.eq.s32.totalorder %s21, 1
      %p107 = scmp.ne.s32.totalorder %s102, %s104
      %p108 = scmp.eq.s32.totalorder %s21, 0
      %p109 = por %p107, %p108
      %p110 = scmp.ne.s32.totalorder %s102, %s104
      %p111 = scmp.eq.s32.totalorder %s26, 1
      %p112 = por %p110, %p111
      %p113 = scmp.ne.s32.totalorder %s104, %s105
      %p114 = scmp.eq.s32.totalorder %s26, 0
      %p115 = por %p113, %p114
      %p116 = scmp.ne.s32.totalorder %s104, %s105
      %p117 = scmp.eq.s32.totalorder %s27, 1
      %p118 = por %p116, %p117
      %p120 = scmp.ne.s32.totalorder %s105, %s119
      %p121 = scmp.eq.s32.totalorder %s27, 0
      %p122 = por %p120, %p121
      %s124 = sadd.s32 %s123, 1
      %p127 = scmp.eq.s32.totalorder %s21, 1
      %p128 = scmp.ne.s32.totalorder %s123, %s125
      %p129 = scmp.eq.s32.totalorder %s21, 0
      %p130 = por %p128, %p129
      %p131 = scmp.ne.s32.totalorder %s123, %s125
      %p132 = scmp.eq.s32.totalorder %s26, 1
      %p133 = por %p131, %p132
      %p134 = scmp.ne.s32.totalorder %s125, %s126
      %p135 = scmp.eq.s32.totalorder %s26, 0
      %p136 = por %p134, %p135
      %p137 = scmp.ne.s32.totalorder %s125, %s126
      %p138 = scmp.eq.s32.totalorder %s27, 1
      %p139 = por %p137, %p138
      %p141 = scmp.ne.s32.totalorder %s126, %s140
      %p142 = scmp.eq.s32.totalorder %s27, 0
      %p143 = por %p141, %p142
      %s144 = ssub.s32 %s21, %s28
      %p145 = scmp.eq.s32.totalorder %s144, 0
      %s147 = sadd.s32 %s146, 1
      %s148 = scalar_select %p145, %s146, %s147
      %p151 = pneg %p145
      %p152 = scmp.eq.s32.totalorder %s21, 1
      %p153 = por %p151, %p152
      %p154 = scmp.ne.s32.totalorder %s146, %s149
      %p155 = scmp.eq.s32.totalorder %s21, 0
      %p156 = por %p154, %p155
      %p157 = scmp.ne.s32.totalorder %s146, %s149
      %p158 = scmp.eq.s32.totalorder %s26, 1
      %p159 = por %p157, %p158
      %p160 = scmp.ne.s32.totalorder %s149, %s150
      %p161 = scmp.eq.s32.totalorder %s26, 0
      %p162 = por %p160, %p161
      %p163 = scmp.ne.s32.totalorder %s149, %s150
      %p164 = scmp.eq.s32.totalorder %s27, 1
      %p165 = por %p163, %p164
      %p167 = scmp.ne.s32.totalorder %s150, %s166
      %p168 = scmp.eq.s32.totalorder %s27, 0
      %p169 = por %p167, %p168
      %p170 = scmp.le.s32.totalorder 1, %s21
      %p171 = scmp.lt.s32.totalorder %s21, 3
      %p172 = pnand %p170, %p171
      %p173 = pneg %p172
      // Predicated region
      $region9: #{tpu_custom_call.1} parent=5 // pred_check
        _
      $region10: #{tpu_custom_call.1} parent=5 // pred_check_branch
        %175 = sbr.rel (%p172) target = $region12
      $region11: #{tpu_custom_call.1} parent=5 // pred_region
        %s176 = ssub.s32 %s21, 1
        // Predicated region
        $region13: #{tpu_custom_call.1} parent=11 // pred_check
          %p177 = pneg %p94
        $region14: #{tpu_custom_call.1} parent=11 // pred_check_branch
          %179 = sbr.rel (%p177) target = $region16
        $region15: #{tpu_custom_call.1} parent=11 // pred_region
          %181 = vsyncadd [#allocation6], 0
          %s182 = sshll.u32 %s2, 4
          %s183 = int_to_ptr.hbm [resolvable:$true] %s182
          %s184 = sshll.u32 [#allocation7], 4
          %s185 = int_to_ptr.vmem [resolvable:$true] %s184
          %190 = dma.hbm_to_vmem [thread:$0]  %s183, 4096, %s185, [#allocation6], 64, 64, 4
        $region16: #{tpu_custom_call.1} parent=11 // pred_fallthru
          _
        // Predicated region
        $region17: #{tpu_custom_call.1} parent=11 // pred_check
          %p191 = pneg %p115
        $region18: #{tpu_custom_call.1} parent=11 // pred_check_branch
          %193 = sbr.rel (%p191) target = $region20
        $region19: #{tpu_custom_call.1} parent=11 // pred_region
          _
        $region20: #{tpu_custom_call.1} parent=11 // pred_fallthru
          _
        // Predicated region
        $region21: #{tpu_custom_call.1} parent=11 // pred_check
          %p194 = pneg %p136
        $region22: #{tpu_custom_call.1} parent=11 // pred_check_branch
          %196 = sbr.rel (%p194) target = $region24
        $region23: #{tpu_custom_call.1} parent=11 // pred_region
          %198 = vsyncadd [#allocation9], 0
          %s200 = sshll.u32 %s4, 4
          %s201 = int_to_ptr.hbm [resolvable:$true] %s200
          %s202 = sshll.u32 [#allocation8], 4
          %s203 = int_to_ptr.vmem [resolvable:$true] %s202
          %205 = dma.hbm_to_vmem [thread:$0]  %s201, 128, %s203, [#allocation9]
        $region24: #{tpu_custom_call.1} parent=11 // pred_fallthru
          _
      $region12: #{tpu_custom_call.1} parent=5 // pred_fallthru
        _
      %p206 = scmp.lt.s32.totalorder %s21, 2
      // Predicated region
      $region25: #{tpu_custom_call.1} parent=5 // pred_check
        %p207 = pneg %p206
      $region26: #{tpu_custom_call.1} parent=5 // pred_check_branch
        %209 = sbr.rel (%p207) target = $region28
      $region27: #{tpu_custom_call.1} parent=5 // pred_region
        // Predicated region
        $region29: #{tpu_custom_call.1} parent=27 // pred_check
          %p210 = pneg %p41
        $region30: #{tpu_custom_call.1} parent=27 // pred_check_branch
          %212 = sbr.rel (%p210) target = $region32
        $region31: #{tpu_custom_call.1} parent=27 // pred_region
          %s213 = sand.u32 %s31, 1
          %s214 = scalar_lea.sflag [#allocation3], %s213
          %s215 = sand.u32 %s31, 1
          %s216 = smul.addr %s215, 32
          %s217 = scalar_lea.vmem [#allocation2], %s216
          %219 = vsyncadd %s214, 0
          %s220 = smul.addr %s21, 8
          %s221 = smul.addr %s220, 4
          %s222 = scalar_lea.hbm %s0, %s221
          %s223 = sshll.u32 %s222, 4
          %s224 = int_to_ptr.hbm [resolvable:$true] %s223
          %s225 = sshll.u32 %s217, 4
          %s226 = int_to_ptr.vmem [resolvable:$true] %s225
          %231 = dma.hbm_to_vmem [thread:$0]  %s224, 512, %s226, %s214, 256, 256, 16
        $region32: #{tpu_custom_call.1} parent=27 // pred_fallthru
          _
        // Predicated region
        $region33: #{tpu_custom_call.1} parent=27 // pred_check
          %p232 = pneg %p67
        $region34: #{tpu_custom_call.1} parent=27 // pred_check_branch
          %234 = sbr.rel (%p232) target = $region36
        $region35: #{tpu_custom_call.1} parent=27 // pred_region
          %s235 = sand.u32 %s21, 1
          %s236 = scalar_lea.sflag [#allocation6], %s235
          %s237 = sand.u32 %s57, 1
          %s238 = smul.addr %s237, 16
          %s239 = scalar_lea.vmem [#allocation5], %s238
          %241 = vsyncadd %s236, 0
          %s242 = smul.addr %s21, 4
          %s243 = smul.addr %s242, 4
          %s244 = scalar_lea.hbm %s1, %s243
          %s246 = sshll.u32 %s244, 4
          %s247 = int_to_ptr.hbm [resolvable:$true] %s246
          %s248 = sshll.u32 %s239, 4
          %s249 = int_to_ptr.vmem [resolvable:$true] %s248
          %251 = dma.hbm_to_vmem [thread:$0]  %s247, 256, %s249, %s236
        $region36: #{tpu_custom_call.1} parent=27 // pred_fallthru
          _
      $region28: #{tpu_custom_call.1} parent=5 // pred_fallthru
        _
      %p252 = scmp.le.s32.totalorder 1, %s21
      %p253 = scmp.lt.s32.totalorder %s21, 3
      %p254 = pnand %p252, %p253
      %p255 = pneg %p254
      // Predicated region
      $region37: #{tpu_custom_call.1} parent=5 // pred_check
        _
      $region38: #{tpu_custom_call.1} parent=5 // pred_check_branch
        %257 = sbr.rel (%p254) target = $region40
      $region39: #{tpu_custom_call.1} parent=5 // pred_region
        %s258 = ssub.s32 %s21, 1
        %s259 = sand.u32 %s34, 1
        %s260 = scalar_lea.sflag [#allocation3], %s259
        %s261 = sand.u32 %s34, 1
        %s262 = smul.addr %s261, 32
        %s263 = scalar_lea.vmem [#allocation2], %s262
        // Predicated region
        $region41: #{tpu_custom_call.1} parent=39 // pred_check
          %p264 = pneg %p47
        $region42: #{tpu_custom_call.1} parent=39 // pred_check_branch
          %266 = sbr.rel (%p264) target = $region44
        $region43: #{tpu_custom_call.1} parent=39 // pred_region
          %268 = dma.done %s260, 512
        $region44: #{tpu_custom_call.1} parent=39 // pred_fallthru
          _
        %s269 = sand.u32 %s26, 1
        %s270 = scalar_lea.sflag [#allocation6], %s269
        %s271 = sand.u32 %s60, 1
        %s272 = smul.addr %s271, 16
        %s273 = scalar_lea.vmem [#allocation5], %s272
        // Predicated region
        $region45: #{tpu_custom_call.1} parent=39 // pred_check
          %p274 = pneg %p73
        $region46: #{tpu_custom_call.1} parent=39 // pred_check_branch
          %276 = sbr.rel (%p274) target = $region48
        $region47: #{tpu_custom_call.1} parent=39 // pred_region
          %278 = dma.done %s270, 256
        $region48: #{tpu_custom_call.1} parent=39 // pred_fallthru
          _
        // Predicated region
        $region49: #{tpu_custom_call.1} parent=39 // pred_check
          %p279 = pneg %p94
        $region50: #{tpu_custom_call.1} parent=39 // pred_check_branch
          %281 = sbr.rel (%p279) target = $region52
        $region51: #{tpu_custom_call.1} parent=39 // pred_region
          %283 = dma.done [#allocation6], 4096
        $region52: #{tpu_custom_call.1} parent=39 // pred_fallthru
          _
        // Predicated region
        $region53: #{tpu_custom_call.1} parent=39 // pred_check
          %p284 = pneg %p136
        $region54: #{tpu_custom_call.1} parent=39 // pred_check_branch
          %286 = sbr.rel (%p284) target = $region56
        $region55: #{tpu_custom_call.1} parent=39 // pred_region
          %288 = dma.done [#allocation9], 128
        $region56: #{tpu_custom_call.1} parent=39 // pred_fallthru
          _
        %s289 = sand.u32 %s34, 1
        %s290 = scalar_lea.sflag [#allocation3], %s289
        %s291 = sand.u32 %s34, 1
        %s292 = smul.addr %s291, 32
        %s293 = scalar_lea.vmem [#allocation2], %s292
        %p294 = pneg %p47
        %p295 = pneg %p44
        %s296 = sand.u32 %s26, 1
        %s297 = scalar_lea.sflag [#allocation6], %s296
        %s298 = sand.u32 %s60, 1
        %s299 = smul.addr %s298, 16
        %s300 = scalar_lea.vmem [#allocation5], %s299
        %p301 = pneg %p73
        %p302 = pneg %p70
        %p303 = pneg %p94
        %p304 = pneg %p91
        %p305 = pneg %p115
        %p306 = pneg %p112
        %p307 = pneg %p136
        %p308 = pneg %p133
        %p309 = pneg %p162
        %p310 = pneg %p159
        %s311 = sand.u32 %s149, 1
        %s312 = scalar_lea.sflag [#allocation4], %s311
        %s313 = sand.u32 %s149, 1
        %s314 = smul.addr %s313, 32
        %s315 = scalar_lea.vmem [#allocation10], %s314
        %v317 = vld [vmem:[%s263] sm:$0xff]
        %v318 = vld [vmem:[%s263 + $0x8] sm:$0xff]
        %v319 = vld [vmem:[%s263 + $0x10] sm:$0xff]
        %v320 = vld [vmem:[%s263 + $0x18] sm:$0xff]
        %v321 = vld [vmem:[#allocation7] sm:$0xf]
        %v322 = vld [vmem:[#allocation7 + $0x4] sm:$0xf]
        %v323 = vld [vmem:[#allocation7 + $0x8] sm:$0xf]
        %v324 = vld [vmem:[#allocation7 + $0xc] sm:$0xf]
        %v325 = vld [vmem:[#allocation7 + $0x10] sm:$0xf]
        %v326 = vld [vmem:[#allocation7 + $0x14] sm:$0xf]
        %v327 = vld [vmem:[#allocation7 + $0x18] sm:$0xf]
        %v328 = vld [vmem:[#allocation7 + $0x1c] sm:$0xf]
        %v329 = vld [vmem:[#allocation7 + $0x20] sm:$0xf]
        %v330 = vld [vmem:[#allocation7 + $0x24] sm:$0xf]
        %v331 = vld [vmem:[#allocation7 + $0x28] sm:$0xf]
        %v332 = vld [vmem:[#allocation7 + $0x2c] sm:$0xf]
        %v333 = vld [vmem:[#allocation7 + $0x30] sm:$0xf]
        %v334 = vld [vmem:[#allocation7 + $0x34] sm:$0xf]
        %v335 = vld [vmem:[#allocation7 + $0x38] sm:$0xf]
        %v336 = vld [vmem:[#allocation7 + $0x3c] sm:$0xf]
        %v337 = vld [vmem:[#allocation7 + $0x40] sm:$0xf]
        %v338 = vld [vmem:[#allocation7 + $0x44] sm:$0xf]
        %v339 = vld [vmem:[#allocation7 + $0x48] sm:$0xf]
        %v340 = vld [vmem:[#allocation7 + $0x4c] sm:$0xf]
        %v341 = vld [vmem:[#allocation7 + $0x50] sm:$0xf]
        %v342 = vld [vmem:[#allocation7 + $0x54] sm:$0xf]
        %v343 = vld [vmem:[#allocation7 + $0x58] sm:$0xf]
        %v344 = vld [vmem:[#allocation7 + $0x5c] sm:$0xf]
        %v345 = vld [vmem:[#allocation7 + $0x60] sm:$0xf]
        %v346 = vld [vmem:[#allocation7 + $0x64] sm:$0xf]
        %v347 = vld [vmem:[#allocation7 + $0x68] sm:$0xf]
        %v348 = vld [vmem:[#allocation7 + $0x6c] sm:$0xf]
        %v349 = vld [vmem:[#allocation7 + $0x70] sm:$0xf]
        %v350 = vld [vmem:[#allocation7 + $0x74] sm:$0xf]
        %v351 = vld [vmem:[#allocation7 + $0x78] sm:$0xf]
        %v352 = vld [vmem:[#allocation7 + $0x7c] sm:$0xf]
        %v353 = vld [vmem:[#allocation7 + $0x80] sm:$0xf]
        %v354 = vld [vmem:[#allocation7 + $0x84] sm:$0xf]
        %v355 = vld [vmem:[#allocation7 + $0x88] sm:$0xf]
        %v356 = vld [vmem:[#allocation7 + $0x8c] sm:$0xf]
        %v357 = vld [vmem:[#allocation7 + $0x90] sm:$0xf]
        %v358 = vld [vmem:[#allocation7 + $0x94] sm:$0xf]
        %v359 = vld [vmem:[#allocation7 + $0x98] sm:$0xf]
        %v360 = vld [vmem:[#allocation7 + $0x9c] sm:$0xf]
        %v361 = vld [vmem:[#allocation7 + $0xa0] sm:$0xf]
        %v362 = vld [vmem:[#allocation7 + $0xa4] sm:$0xf]
        %v363 = vld [vmem:[#allocation7 + $0xa8] sm:$0xf]
        %v364 = vld [vmem:[#allocation7 + $0xac] sm:$0xf]
        %v365 = vld [vmem:[#allocation7 + $0xb0] sm:$0xf]
        %v366 = vld [vmem:[#allocation7 + $0xb4] sm:$0xf]
        %v367 = vld [vmem:[#allocation7 + $0xb8] sm:$0xf]
        %v368 = vld [vmem:[#allocation7 + $0xbc] sm:$0xf]
        %v369 = vld [vmem:[#allocation7 + $0xc0] sm:$0xf]
        %v370 = vld [vmem:[#allocation7 + $0xc4] sm:$0xf]
        %v371 = vld [vmem:[#allocation7 + $0xc8] sm:$0xf]
        %v372 = vld [vmem:[#allocation7 + $0xcc] sm:$0xf]
        %v373 = vld [vmem:[#allocation7 + $0xd0] sm:$0xf]
        %v374 = vld [vmem:[#allocation7 + $0xd4] sm:$0xf]
        %v375 = vld [vmem:[#allocation7 + $0xd8] sm:$0xf]
        %v376 = vld [vmem:[#allocation7 + $0xdc] sm:$0xf]
        %v377 = vld [vmem:[#allocation7 + $0xe0] sm:$0xf]
        %v378 = vld [vmem:[#allocation7 + $0xe4] sm:$0xf]
        %v379 = vld [vmem:[#allocation7 + $0xe8] sm:$0xf]
        %v380 = vld [vmem:[#allocation7 + $0xec] sm:$0xf]
        %v381 = vld [vmem:[#allocation7 + $0xf0] sm:$0xf]
        %v382 = vld [vmem:[#allocation7 + $0xf4] sm:$0xf]
        %v383 = vld [vmem:[#allocation7 + $0xf8] sm:$0xf]
        %v384 = vld [vmem:[#allocation7 + $0xfc] sm:$0xf]
        %v385 = vld [vmem:[%s3] sm:$0x1]
        %v387 = vperm.slane %v385, 0
        %v393 = vunpack.c.l.b16 %v317
        %v394 = vunpack.c.h.b16 %v317
        %v395 = vunpack.c.l.b16 %v318
        %v396 = vunpack.c.h.b16 %v318
        %v397 = vunpack.c.l.b16 %v319
        %v398 = vunpack.c.h.b16 %v319
        %v399 = vunpack.c.l.b16 %v320
        %v400 = vunpack.c.h.b16 %v320
        %v401 = vpack.c.b16 %v397, %v393
        %v402 = vpack.c.b16 %v398, %v394
        %v403 = vpack.c.b16 %v399, %v395
        %v404 = vpack.c.b16 %v400, %v396
        %v473 = vunpack.c.l.b16 %v321
        %v474 = vunpack.c.l.b16 %v322
        %v475 = vunpack.c.l.b16 %v323
        %v476 = vunpack.c.l.b16 %v324
        %v477 = vunpack.c.l.b16 %v325
        %v478 = vunpack.c.l.b16 %v326
        %v479 = vunpack.c.l.b16 %v327
        %v480 = vunpack.c.l.b16 %v328
        %v481 = vunpack.c.l.b16 %v329
        %v482 = vunpack.c.l.b16 %v330
        %v483 = vunpack.c.l.b16 %v331
        %v484 = vunpack.c.l.b16 %v332
        %v485 = vunpack.c.l.b16 %v333
        %v486 = vunpack.c.l.b16 %v334
        %v487 = vunpack.c.l.b16 %v335
        %v488 = vunpack.c.l.b16 %v336
        %v489 = vunpack.c.l.b16 %v337
        %v490 = vunpack.c.l.b16 %v338
        %v491 = vunpack.c.l.b16 %v339
        %v492 = vunpack.c.l.b16 %v340
        %v493 = vunpack.c.l.b16 %v341
        %v494 = vunpack.c.l.b16 %v342
        %v495 = vunpack.c.l.b16 %v343
        %v496 = vunpack.c.l.b16 %v344
        %v497 = vunpack.c.l.b16 %v345
        %v498 = vunpack.c.l.b16 %v346
        %v499 = vunpack.c.l.b16 %v347
        %v500 = vunpack.c.l.b16 %v348
        %v501 = vunpack.c.l.b16 %v349
        %v502 = vunpack.c.l.b16 %v350
        %v503 = vunpack.c.l.b16 %v351
        %v504 = vunpack.c.l.b16 %v352
        %v505 = vunpack.c.l.b16 %v353
        %v506 = vunpack.c.l.b16 %v354
        %v507 = vunpack.c.l.b16 %v355
        %v508 = vunpack.c.l.b16 %v356
        %v509 = vunpack.c.l.b16 %v357
        %v510 = vunpack.c.l.b16 %v358
        %v511 = vunpack.c.l.b16 %v359
        %v512 = vunpack.c.l.b16 %v360
        %v513 = vunpack.c.l.b16 %v361
        %v514 = vunpack.c.l.b16 %v362
        %v515 = vunpack.c.l.b16 %v363
        %v516 = vunpack.c.l.b16 %v364
        %v517 = vunpack.c.l.b16 %v365
        %v518 = vunpack.c.l.b16 %v366
        %v519 = vunpack.c.l.b16 %v367
        %v520 = vunpack.c.l.b16 %v368
        %v521 = vunpack.c.l.b16 %v369
        %v522 = vunpack.c.l.b16 %v370
        %v523 = vunpack.c.l.b16 %v371
        %v524 = vunpack.c.l.b16 %v372
        %v525 = vunpack.c.l.b16 %v373
        %v526 = vunpack.c.l.b16 %v374
        %v527 = vunpack.c.l.b16 %v375
        %v528 = vunpack.c.l.b16 %v376
        %v529 = vunpack.c.l.b16 %v377
        %v530 = vunpack.c.l.b16 %v378
        %v531 = vunpack.c.l.b16 %v379
        %v532 = vunpack.c.l.b16 %v380
        %v533 = vunpack.c.l.b16 %v381
        %v534 = vunpack.c.l.b16 %v382
        %v535 = vunpack.c.l.b16 %v383
        %v536 = vunpack.c.l.b16 %v384
        %v537 = vpack.c.b16 %v474, %v473
        %v538 = vpack.c.b16 %v476, %v475
        %v539 = vpack.c.b16 %v478, %v477
        %v540 = vpack.c.b16 %v480, %v479
        %v541 = vpack.c.b16 %v482, %v481
        %v542 = vpack.c.b16 %v484, %v483
        %v543 = vpack.c.b16 %v486, %v485
        %v544 = vpack.c.b16 %v488, %v487
        %v545 = vpack.c.b16 %v490, %v489
        %v546 = vpack.c.b16 %v492, %v491
        %v547 = vpack.c.b16 %v494, %v493
        %v548 = vpack.c.b16 %v496, %v495
        %v549 = vpack.c.b16 %v498, %v497
        %v550 = vpack.c.b16 %v500, %v499
        %v551 = vpack.c.b16 %v502, %v501
        %v552 = vpack.c.b16 %v504, %v503
        %v553 = vpack.c.b16 %v506, %v505
        %v554 = vpack.c.b16 %v508, %v507
        %v555 = vpack.c.b16 %v510, %v509
        %v556 = vpack.c.b16 %v512, %v511
        %v557 = vpack.c.b16 %v514, %v513
        %v558 = vpack.c.b16 %v516, %v515
        %v559 = vpack.c.b16 %v518, %v517
        %v560 = vpack.c.b16 %v520, %v519
        %v561 = vpack.c.b16 %v522, %v521
        %v562 = vpack.c.b16 %v524, %v523
        %v563 = vpack.c.b16 %v526, %v525
        %v564 = vpack.c.b16 %v528, %v527
        %v565 = vpack.c.b16 %v530, %v529
        %v566 = vpack.c.b16 %v532, %v531
        %v567 = vpack.c.b16 %v534, %v533
        %v568 = vpack.c.b16 %v536, %v535
        %601 = vmatpush.bf16.msra.mxu0 %v544
        %602 = vmatpush.bf16.msra.mxu0 %v543
        %603 = vmatpush.bf16.msra.mxu0 %v542
        %604 = vmatpush.bf16.msra.mxu0 %v541
        %605 = vmatpush.bf16.msra.mxu0 %v540
        %606 = vmatpush.bf16.msra.mxu0 %v539
        %607 = vmatpush.bf16.msra.mxu0 %v538
        %608 = vmatpush.bf16.msra.mxu0 %v537
        %609 = vmatmul.bf16.gmra.mxu0 %v401
        %v610 = vpop.f32.mrf.mxu0
        %v611 = vadd.f32 %v387, %v610
        %v612 = vpop.f32.mrf.mxu0
        %v613 = vadd.f32 %v387, %v612
        %614 = vdwg.mxu0
        %615 = vmatpush.bf16.msra.mxu0 %v552
        %616 = vmatpush.bf16.msra.mxu0 %v551
        %617 = vmatpush.bf16.msra.mxu0 %v550
        %618 = vmatpush.bf16.msra.mxu0 %v549
        %619 = vmatpush.bf16.msra.mxu0 %v548
        %620 = vmatpush.bf16.msra.mxu0 %v547
        %621 = vmatpush.bf16.msra.mxu0 %v546
        %622 = vmatpush.bf16.msra.mxu0 %v545
        %623 = vmatmul.bf16.gmra.mxu0 %v402
        %v624 = vpop.f32.mrf.mxu0
        %v625 = vadd.f32 %v611, %v624
        %v626 = vpop.f32.mrf.mxu0
        %v627 = vadd.f32 %v613, %v626
        %628 = vdwg.mxu0
        %629 = vmatpush.bf16.msra.mxu0 %v560
        %630 = vmatpush.bf16.msra.mxu0 %v559
        %631 = vmatpush.bf16.msra.mxu0 %v558
        %632 = vmatpush.bf16.msra.mxu0 %v557
        %633 = vmatpush.bf16.msra.mxu0 %v556
        %634 = vmatpush.bf16.msra.mxu0 %v555
        %635 = vmatpush.bf16.msra.mxu0 %v554
        %636 = vmatpush.bf16.msra.mxu0 %v553
        %637 = vmatmul.bf16.gmra.mxu0 %v403
        %v638 = vpop.f32.mrf.mxu0
        %v639 = vadd.f32 %v625, %v638
        %v640 = vpop.f32.mrf.mxu0
        %v641 = vadd.f32 %v627, %v640
        %642 = vdwg.mxu0
        %643 = vmatpush.bf16.msra.mxu0 %v568
        %644 = vmatpush.bf16.msra.mxu0 %v567
        %645 = vmatpush.bf16.msra.mxu0 %v566
        %646 = vmatpush.bf16.msra.mxu0 %v565
        %647 = vmatpush.bf16.msra.mxu0 %v564
        %648 = vmatpush.bf16.msra.mxu0 %v563
        %649 = vmatpush.bf16.msra.mxu0 %v562
        %650 = vmatpush.bf16.msra.mxu0 %v561
        %651 = vmatmul.bf16.gmra.mxu0 %v404
        %v652 = vpop.f32.mrf.mxu0
        %v653 = vadd.f32 %v639, %v652
        %v654 = vpop.f32.mrf.mxu0
        %v655 = vadd.f32 %v641, %v654
        %656 = vdwg.mxu0
        %v657 = vmul.f32 %v653, %v653
        %v658 = vmul.f32 %v655, %v655
        %659 = vadd.xlane.f32.xlu0 %v657
        %v660 = vpop.xlane.xlu0 %659
        %661 = vadd.xlane.f32.xlu0 %v658
        %v662 = vpop.xlane.xlu0 %661
        %v663 = vmax.f32 %v660, 1e-24
        %v664 = vmax.f32 %v662, 1e-24
        %v665 = vrsqrt.pop %v663
        %v666 = vmul.f32 %v665, %v663
        %v667 = vmul.f32 %v666, %v665
        %v668 = vmul.f32 0.5, %v667
        %v669 = vsub.f32 1.5, %v668
        %v670 = vmul.f32 %v665, %v669
        %vm671 = vweird.f32 %v663
        %vm672 = vweird.f32 %v665
        %vm673 = vmor %vm671, %vm672
        %v674 = vsel %vm673, %v665, %v670
        %v675 = vrsqrt.pop %v664
        %v676 = vmul.f32 %v675, %v664
        %v677 = vmul.f32 %v676, %v675
        %v678 = vmul.f32 0.5, %v677
        %v679 = vsub.f32 1.5, %v678
        %v680 = vmul.f32 %v675, %v679
        %vm681 = vweird.f32 %v664
        %vm682 = vweird.f32 %v675
        %vm683 = vmor %vm681, %vm682
        %v684 = vsel %vm683, %v675, %v680
        %v685 = vmul.f32 %v663, 0.5
        %v686 = vmul.f32 %v664, 0.5
        %v687 = vmul.f32 %v685, %v674
        %v688 = vmul.f32 %v686, %v684
        %v689 = vmul.f32 %v687, %v674
        %v690 = vmul.f32 %v688, %v684
        %v691 = vsub.f32 1.5, %v689
        %v692 = vsub.f32 1.5, %v690
        %v693 = vmul.f32 %v674, %v691
        %v694 = vmul.f32 %v684, %v692
        %v695 = vmul.f32 %v653, %v693
        %v696 = vmul.f32 %v655, %v694
        %v697 = vmul.f32 %v695, 30.0
        %v698 = vpack.c.bf16 %v697, %v697
        %v699 = vpack.c.bf16 %v696, %v696
        %v700 = vld [vmem:[#allocation8] sm:$0xff]
        %701 = vmatpush.bf16.xpose.msra.mxu0 0
        %702 = vmatpush.bf16.xpose.msra.mxu0 0
        %703 = vmatpush.bf16.xpose.msra.mxu0 0
        %704 = vmatpush.bf16.xpose.msra.mxu0 0
        %705 = vmatpush.bf16.xpose.msra.mxu0 0
        %706 = vmatpush.bf16.xpose.msra.mxu0 0
        %707 = vmatpush.bf16.xpose.msra.mxu0 0
        %708 = vmatpush.bf16.xpose.msra.mxu0 %v699
        %709 = vmatmul.bf16.gmra.mxu0 %v698
        %v710 = vpop.f32.mrf.mxu0
        %v711 = vadd.f32 %v700, %v710
        %v712 = vpop.f32.mrf.mxu0
        %713 = vdwg.mxu0
        %vm714 = vcmask 64512
        %v715 = vsel %vm714, %v711, -inf
        %716 = vmax.xlane.f32.xlu0 %v715
        %v717 = vpop.xlane.xlu0 %716
        %v718 = vsub.f32 %v711, %v717
        %v719 = vmul.f32 %v718, 1.442695
        %v720 = vpow.pop %v719
        %v721 = vsel %vm714, %v720, 0.0
        %722 = vadd.xlane.f32.xlu0 %v721
        %v723 = vpop.xlane.xlu0 %722
        %v724 = vrcp.pop %v723
        %v725 = vmul.f32 %v723, %v724
        %v726 = vsub.f32 1.0, %v725
        %v727 = vmul.f32 %v724, %v726
        %v728 = vadd.f32 %v724, %v727
        %vm729 = vweird.f32 %v723
        %vm730 = vweird.f32 %v724
        %vm731 = vmor %vm729, %vm730
        %v732 = vsel %vm731, %v724, %v728
        %v733 = vand.u32 2147483647, %v723
        %vm734 = vcmp.eq.f32.partialorder %v733, 8.507059e+37
        %v735 = vand.u32 %v723, 2147483648
        %v736 = vor.u32 1.1754944e-38, %v735
        %v737 = vsel %vm734, %v736, %v732
        %v738 = vmul.f32 %v720, %v737
        %v739 = vpack.c.bf16 %v738, %v738
        %v740 = vld [vmem:[%s273] sm:$0xff]
        %v741 = vld [vmem:[%s273 + $0x8] sm:$0xff]
        %v744 = vunpack.c.l.b16 %v740
        %v745 = vunpack.c.h.b16 %v740
        %v746 = vunpack.c.l.b16 %v741
        %v747 = vunpack.c.h.b16 %v741
        %v748 = vpack.c.b16 %v744, %v744
        %v749 = vpack.c.b16 %v745, %v745
        %v750 = vpack.c.b16 %v746, %v746
        %v751 = vpack.c.b16 %v747, %v747
        %v753 = vsel %vm714, %v739, 0
        %vm755 = vcmask 1043456
        %v757 = vsel %vm755, %v748, 0
        %v760 = vsel %vm755, %v749, 0
        %v763 = vsel %vm755, %v750, 0
        %v766 = vsel %vm755, %v751, 0
        %768 = vmatpush.bf16.msra.mxu0 0
        %769 = vmatpush.bf16.msra.mxu0 0
        %770 = vmatpush.bf16.msra.mxu0 0
        %771 = vmatpush.bf16.msra.mxu0 0
        %772 = vmatpush.bf16.msra.mxu0 0
        %773 = vmatpush.bf16.msra.mxu0 0
        %774 = vmatpush.bf16.msra.mxu0 0
        %775 = vmatpush.bf16.msra.mxu0 %v757
        %776 = vmatmul.bf16.gmra.mxu0 %v753
        %v777 = vpop.f32.mrf.mxu0
        %v778 = vadd.f32 0.0, %v777
        %v779 = vpop.f32.mrf.mxu0
        %780 = vdwg.mxu0
        %781 = vmatpush.bf16.msra.mxu0 0
        %782 = vmatpush.bf16.msra.mxu0 0
        %783 = vmatpush.bf16.msra.mxu0 0
        %784 = vmatpush.bf16.msra.mxu0 0
        %785 = vmatpush.bf16.msra.mxu0 0
        %786 = vmatpush.bf16.msra.mxu0 0
        %787 = vmatpush.bf16.msra.mxu0 0
        %788 = vmatpush.bf16.msra.mxu0 %v760
        %789 = vmatmul.bf16.gmra.mxu0 %v753
        %v790 = vpop.f32.mrf.mxu0
        %v791 = vadd.f32 0.0, %v790
        %v792 = vpop.f32.mrf.mxu0
        %793 = vdwg.mxu0
        %794 = vmatpush.bf16.msra.mxu0 0
        %795 = vmatpush.bf16.msra.mxu0 0
        %796 = vmatpush.bf16.msra.mxu0 0
        %797 = vmatpush.bf16.msra.mxu0 0
        %798 = vmatpush.bf16.msra.mxu0 0
        %799 = vmatpush.bf16.msra.mxu0 0
        %800 = vmatpush.bf16.msra.mxu0 0
        %801 = vmatpush.bf16.msra.mxu0 %v763
        %802 = vmatmul.bf16.gmra.mxu0 %v753
        %v803 = vpop.f32.mrf.mxu0
        %v804 = vadd.f32 0.0, %v803
        %v805 = vpop.f32.mrf.mxu0
        %806 = vdwg.mxu0
        %807 = vmatpush.bf16.msra.mxu0 0
        %808 = vmatpush.bf16.msra.mxu0 0
        %809 = vmatpush.bf16.msra.mxu0 0
        %810 = vmatpush.bf16.msra.mxu0 0
        %811 = vmatpush.bf16.msra.mxu0 0
        %812 = vmatpush.bf16.msra.mxu0 0
        %813 = vmatpush.bf16.msra.mxu0 0
        %814 = vmatpush.bf16.msra.mxu0 %v766
        %815 = vmatmul.bf16.gmra.mxu0 %v753
        %v816 = vpop.f32.mrf.mxu0
        %v817 = vadd.f32 0.0, %v816
        %v818 = vpop.f32.mrf.mxu0
        %819 = vdwg.mxu0
        %820 = vst [vmem:[%s315] sm:$0xff] %v778
        %821 = vst [vmem:[%s315 + $0x8] sm:$0xff] %v791
        %822 = vst [vmem:[%s315 + $0x10] sm:$0xff] %v804
        %823 = vst [vmem:[%s315 + $0x18] sm:$0xff] %v817
        %s824 = sand.u32 %s149, 1
        %s825 = scalar_lea.sflag [#allocation4], %s824
        %s826 = sand.u32 %s149, 1
        %s827 = smul.addr %s826, 32
        %s828 = scalar_lea.vmem [#allocation10], %s827
        // Predicated region
        $region57: #{tpu_custom_call.1} parent=39 // pred_check
          %p829 = pneg %p159
        $region58: #{tpu_custom_call.1} parent=39 // pred_check_branch
          %831 = sbr.rel (%p829) target = $region60
        $region59: #{tpu_custom_call.1} parent=39 // pred_region
          %833 = vsyncadd %s825, 0
          %s834 = smul.addr %s26, 4
          %s835 = smul.addr %s834, 8
          %s836 = scalar_lea.hbm %s5, %s835
          %s838 = sshll.u32 %s828, 4
          %s839 = int_to_ptr.vmem [resolvable:$true] %s838
          %s840 = sshll.u32 %s836, 4
          %s841 = int_to_ptr.hbm [resolvable:$true] %s840
          %843 = dma.vmem_to_hbm [thread:$0]  %s839, 512, %s841, %s825
        $region60: #{tpu_custom_call.1} parent=39 // pred_fallthru
          _
      $region40: #{tpu_custom_call.1} parent=5 // pred_fallthru
        _
      %p844 = scmp.le.s32.totalorder 2, %s21
      // Predicated region
      $region61: #{tpu_custom_call.1} parent=5 // pred_check
        %p845 = pneg %p844
      $region62: #{tpu_custom_call.1} parent=5 // pred_check_branch
        %847 = sbr.rel (%p845) target = $region64
      $region63: #{tpu_custom_call.1} parent=5 // pred_region
        %s848 = ssub.s32 %s21, 2
        // Predicated region
        $region65: #{tpu_custom_call.1} parent=63 // pred_check
          %p849 = pneg %p165
        $region66: #{tpu_custom_call.1} parent=63 // pred_check_branch
          %851 = sbr.rel (%p849) target = $region68
        $region67: #{tpu_custom_call.1} parent=63 // pred_region
          %s852 = sand.u32 %s150, 1
          %s853 = scalar_lea.sflag [#allocation4], %s852
          %s854 = sand.u32 %s150, 1
          %s855 = smul.addr %s854, 32
          %s856 = scalar_lea.vmem [#allocation10], %s855
          %858 = dma.done %s853, 512
        $region68: #{tpu_custom_call.1} parent=63 // pred_fallthru
          _
      $region64: #{tpu_custom_call.1} parent=5 // pred_fallthru
        _
    $region6: #{tpu_custom_call.1} parent=1 // loop_footer
      %s25 = sadd.s32 1, %s21
    $region7: #{tpu_custom_call.1} parent=1 // loop_footer_branch
      %20 = sbr.rel target = $region3
    $region8: #{tpu_custom_call.1} parent=1 // loop_exit
      _
    %859 = vsyncpa [#allocation3], 1
    %s860 = scalar_lea.sflag [#allocation3], 1
    %861 = vsyncpa %s860, 1
    %862 = vsyncpa [#allocation6], 1
    %s863 = scalar_lea.sflag [#allocation6], 1
    %864 = vsyncpa %s863, 1
    %865 = vsyncpa [#allocation9], 1
    %866 = vsyncpa [#allocation4], 1
    %s867 = scalar_lea.sflag [#allocation4], 1
    %868 = vsyncpa %s867, 1

</llo_original>
